<compile_context>
chip_gen: v7x
topology: tpu7x:2x2x1
jax: 0.10.0
libtpu: 0.0.40
codegen_flags: <defaults>
</compile_context>

<pallas_src>
import functools

import jax
import jax.numpy as jnp
from jax import lax
from jax.experimental import pallas as pl
from jax.experimental.pallas import tpu as pltpu


OUT_W = 128  # lane-dense output slab width (one full vreg lane span)


# ----------------------------------------------------------------------------
# Pallas kernel: the whole forward pass
# ----------------------------------------------------------------------------
def ppo_gnn_kernel(
    src_ref, dst_ref, cp_ref, x_ref,
    w_g1_ref, b_g1_ref, w_g2_ref, b_g2_ref,
    w_h1_ref, b_h1_ref, w_h2_ref, b_h2_ref,
    w_c1_ref, b_c1_ref, w_c2_ref, b_c2_ref,
    out_ref, *, num_partitions,
):
    f32 = jnp.float32
    bf16 = jnp.bfloat16
    P = num_partitions
    N = x_ref.shape[0]
    E = dst_ref.shape[0]

    # ---- build row-normalized adjacency in-kernel (SimpleGCNConv semantics) --
    # adj_raw[n, m] = #edges with src == n and dst == m, via an MXU matmul of
    # the two one-hot matrices (no scatter needed).
    src = src_ref[...]                                                 # [1, E]
    dst = dst_ref[...]                                                 # [E, 1]
    src_oh = (lax.broadcasted_iota(jnp.int32, (N, E), 0) == src).astype(bf16)  # [N,E]
    dst_oh = (dst == lax.broadcasted_iota(jnp.int32, (E, N), 1)).astype(bf16)  # [E,N]
    adj_raw = jnp.dot(src_oh, dst_oh, preferred_element_type=f32)      # [N, N]
    eye = (lax.broadcasted_iota(jnp.int32, (N, N), 0)
           == lax.broadcasted_iota(jnp.int32, (N, N), 1)).astype(f32)
    adj = jnp.where(adj_raw > 0.5, 1.0, 0.0) + eye                     # A + I (dupes -> 1)
    deg = jnp.sum(adj, axis=1, keepdims=True)
    deg = jnp.where(deg > 0.0, deg, 1.0)
    adj = (adj / deg).astype(bf16)                                     # D^-1 (A + I)

    # ---- GNN layer 1: adj @ x, linear, relu ----
    # TODO(synk): training-mode dropout (p=0.1) omitted — matches module.eval().
    h = jnp.dot(adj, x_ref[...], preferred_element_type=f32)
    h = jnp.dot(h.astype(bf16), w_g1_ref[...], preferred_element_type=f32) + b_g1_ref[...]
    h = jnp.maximum(h, 0.0)

    # ---- GNN layer 2: adj @ h, linear (no activation on last layer) ----
    h = jnp.dot(adj, h.astype(bf16), preferred_element_type=f32)
    h = jnp.dot(h.astype(bf16), w_g2_ref[...], preferred_element_type=f32) + b_g2_ref[...]
    # h: [N, H] f32

    # ---- fused node + partition heads (2 matmuls instead of 4) ----
    h_bf = h.astype(bf16)
    h1 = jnp.dot(h_bf, w_h1_ref[...], preferred_element_type=f32) + b_h1_ref[...]
    h1 = jnp.maximum(h1, 0.0)                                          # [N, 2*H2]
    # w_h2 is block-diagonal, zero-padded to OUT_W lanes:
    #   col 0      -> node logit, cols 1..P -> partition logits, rest -> 0
    head = jnp.dot(h1.astype(bf16), w_h2_ref[...], preferred_element_type=f32) + b_h2_ref[...]

    # ---- critic on mean-pooled graph representation ----
    g = jnp.mean(h, axis=0, keepdims=True)                             # [1, H]
    c = jnp.dot(g.astype(bf16), w_c1_ref[...], preferred_element_type=f32) + b_c1_ref[...]
    c = jnp.maximum(c, 0.0)
    v = jnp.dot(c.astype(bf16), w_c2_ref[...], preferred_element_type=f32) + b_c2_ref[...]  # [1,1]

    # ---- action mask (_apply_action_mask) + lane-dense output assembly ----
    cp = cp_ref[...]                                                   # [N, 1] int32
    cp_oh = (cp == lax.broadcasted_iota(jnp.int32, (N, P), 1)).astype(f32)   # [N, P]
    counts = jnp.sum(cp_oh, axis=0, keepdims=True)                     # [1, P] bincount
    own_count = jnp.sum(cp_oh * counts, axis=1, keepdims=True)         # [N, 1] counts[cp[i]]
    locked = own_count <= 1.0                                          # would empty partition

    col = lax.broadcasted_iota(jnp.int32, (N, OUT_W), 1)
    is_part_col = jnp.logical_and(col >= 1, col <= P)
    not_own = (col - 1) != cp
    mask = jnp.logical_and(is_part_col, jnp.logical_and(locked, not_own))
    out = jnp.where(mask, -jnp.inf, head)
    out = out + jnp.where(col == P + 1, v, 0.0)                        # value in col P+1
    out_ref[...] = out


# ----------------------------------------------------------------------------
# Wrapper
# ----------------------------------------------------------------------------
def ppo_gnn_forward(node_features, edge_index, current_partition, params,
                    num_partitions):
    """Returns dict with node_logits [N], partition_logits [N,P], value scalar."""
    bf16 = jnp.bfloat16
    f32 = jnp.float32

    N, F = node_features.shape
    E = edge_index.shape[1]
    P = num_partitions
    H = params["w_g1"].shape[1]
    H2 = params["w_ns1"].shape[1]
    W1 = 2 * H2
    assert P + 2 <= OUT_W, "partition count must fit in the 128-lane output slab"

    # ---- fuse the two head MLPs (done once per call; constant-folds under jit) --
    w_h1 = jnp.concatenate([params["w_ns1"], params["w_ps1"]], axis=1).astype(bf16)  # [H, W1]
    b_h1 = jnp.concatenate([params["b_ns1"], params["b_ps1"]], axis=1).astype(f32)   # [1, W1]
    w_h2 = jnp.zeros((W1, OUT_W), f32)
    w_h2 = w_h2.at[:H2, 0:1].set(params["w_ns2"])
    w_h2 = w_h2.at[H2:, 1:1 + P].set(params["w_ps2"])
    w_h2 = w_h2.astype(bf16)
    b_h2 = jnp.zeros((1, OUT_W), f32)
    b_h2 = b_h2.at[:, 0:1].set(params["b_ns2"])
    b_h2 = b_h2.at[:, 1:1 + P].set(params["b_ps2"])

    src = edge_index[0].reshape(1, E).astype(jnp.int32)
    dst = edge_index[1].reshape(E, 1).astype(jnp.int32)
    cp = current_partition.reshape(N, 1).astype(jnp.int32)
    x = node_features.astype(bf16)

    inputs = (
        src, dst, cp, x,
        params["w_g1"].astype(bf16), params["b_g1"].astype(f32),
        params["w_g2"].astype(bf16), params["b_g2"].astype(f32),
        w_h1, b_h1, w_h2, b_h2,
        params["w_c1"].astype(bf16), params["b_c1"].astype(f32),
        params["w_c2"].astype(bf16), params["b_c2"].astype(f32),
    )

    in_bytes = sum(int(a.size) * a.dtype.itemsize for a in inputs)
    out_bytes = N * OUT_W * 4
    flops = 2 * (E * N * N          # one-hot adjacency build
                 + N * N * F + N * F * H      # GCN layer 1
                 + N * N * H + N * H * H      # GCN layer 2
                 + N * H * W1 + N * W1 * OUT_W  # fused heads
                 + H * H + H)                 # critic
    cost = pl.CostEstimate(flops=flops, transcendentals=0,
                           bytes_accessed=in_bytes + out_bytes)
    vmem_limit = min(max(4 * (in_bytes + out_bytes) + (1 << 20), 16 << 20), 100 << 20)

    kernel = functools.partial(ppo_gnn_kernel, num_partitions=P)
    slab = pl.pallas_call(
        kernel,
        out_shape=jax.ShapeDtypeStruct((N, OUT_W), jnp.float32),
        in_specs=[pl.BlockSpec(memory_space=pltpu.MemorySpace.VMEM)] * len(inputs),
        out_specs=pl.BlockSpec(memory_space=pltpu.MemorySpace.VMEM),
        compiler_params=pltpu.CompilerParams(vmem_limit_bytes=int(vmem_limit)),
        cost_estimate=cost,
    )(*inputs)

    return {
        "node_logits": slab[:, 0],             # [N]
        "partition_logits": slab[:, 1:1 + P],  # [N, P]
        "value": slab[0, P + 1],               # scalar
    }


# ----------------------------------------------------------------------------
# Deterministic parameter init (mimics the nn.Linear shapes of the module)
# ----------------------------------------------------------------------------
def init_params(key, node_feature_dim, num_partitions, hidden_dim):
    H, H2, F, P = hidden_dim, hidden_dim // 2, node_feature_dim, num_partitions

    def linear(key, fan_in, fan_out):
        kw, kb = jax.random.split(key)
        bound = 1.0 / jnp.sqrt(fan_in)
        w = jax.random.uniform(kw, (fan_in, fan_out), jnp.float32, -bound, bound)
        b = jax.random.uniform(kb, (1, fan_out), jnp.float32, -bound, bound)
        return w, b

    keys = jax.random.split(key, 8)
    p = {}
    p["w_g1"], p["b_g1"] = linear(keys[0], F, H)     # GCN layer 1 linear
    p["w_g2"], p["b_g2"] = linear(keys[1], H, H)     # GCN layer 2 linear
    p["w_ns1"], p["b_ns1"] = linear(keys[2], H, H2)  # node_selector[0]
    p["w_ns2"], p["b_ns2"] = linear(keys[3], H2, 1)  # node_selector[2]
    p["w_ps1"], p["b_ps1"] = linear(keys[4], H, H2)  # partition_selector[0]
    p["w_ps2"], p["b_ps2"] = linear(keys[5], H2, P)  # partition_selector[2]
    p["w_c1"], p["b_c1"] = linear(keys[6], H, H)     # critic[0]
    p["w_c2"], p["b_c2"] = linear(keys[7], H, 1)     # critic[2]
    return p


# ----------------------------------------------------------------------------
# Main
# ----------------------------------------------------------------------------
if __name__ == "__main__":
    NUM_NODES = 16
    NODE_FEATURE_DIM = 8
    NUM_PARTITIONS = 4
    HIDDEN_DIM = 32

    key = jax.random.PRNGKey(0)
    k_feat, k_params = jax.random.split(key)

    # node_features: [num_nodes, feature_dim]
    node_features = jax.random.normal(
        k_feat, (NUM_NODES, NODE_FEATURE_DIM), jnp.float32)

    # edge_index: [2, num_edges] — a deterministic bidirectional ring.
    src = jnp.arange(NUM_NODES, dtype=jnp.int32)
    dst = (src + 1) % NUM_NODES
    edge_index = jnp.stack(
        [jnp.concatenate([src, dst]), jnp.concatenate([dst, src])], axis=0)

    # current_partition: [num_nodes]; partition 0 has exactly one node so the
    # action-mask path is exercised.
    current_partition = jnp.concatenate(
        [jnp.array([0], jnp.int32),
         (jnp.arange(NUM_NODES - 1, dtype=jnp.int32) % (NUM_PARTITIONS - 1)) + 1])

    params = init_params(k_params, NODE_FEATURE_DIM, NUM_PARTITIONS, HIDDEN_DIM)

    out = ppo_gnn_forward(node_features, edge_index, current_partition,
                          params, NUM_PARTITIONS)
    jax.block_until_ready(out)

    assert out["node_logits"].shape == (NUM_NODES,)
    assert out["partition_logits"].shape == (NUM_NODES, NUM_PARTITIONS)
    assert out["value"].shape == ()
    # node 0 is the sole member of partition 0 -> all other partitions masked.
    assert bool(jnp.all(jnp.isneginf(out["partition_logits"][0, 1:])))
    # node 0's own partition and all finite logits stay finite.
    assert bool(jnp.isfinite(out["partition_logits"][0, 0]))
    assert bool(jnp.all(jnp.isfinite(out["node_logits"])))
    assert bool(jnp.isfinite(out["value"]))

    print("KERNEL_OK")
</pallas_src>

<mosaic_0001>
module attributes {stable_mosaic.version = 11 : i64} {
  func.func @ppo_gnn_kernel(%arg0: memref<1x32xi32, #tpu.memory_space<vmem>>, %arg1: memref<32x1xi32, #tpu.memory_space<vmem>>, %arg2: memref<16x1xi32, #tpu.memory_space<vmem>>, %arg3: memref<16x8xbf16, #tpu.memory_space<vmem>>, %arg4: memref<8x32xbf16, #tpu.memory_space<vmem>>, %arg5: memref<1x32xf32, #tpu.memory_space<vmem>>, %arg6: memref<32x32xbf16, #tpu.memory_space<vmem>>, %arg7: memref<1x32xf32, #tpu.memory_space<vmem>>, %arg8: memref<32x32xbf16, #tpu.memory_space<vmem>>, %arg9: memref<1x32xf32, #tpu.memory_space<vmem>>, %arg10: memref<32x128xbf16, #tpu.memory_space<vmem>>, %arg11: memref<1x128xf32, #tpu.memory_space<vmem>>, %arg12: memref<32x32xbf16, #tpu.memory_space<vmem>>, %arg13: memref<1x32xf32, #tpu.memory_space<vmem>>, %arg14: memref<32x1xbf16, #tpu.memory_space<vmem>>, %arg15: memref<1x1xf32, #tpu.memory_space<vmem>>, %arg16: memref<16x128xf32, #tpu.memory_space<vmem>>) attributes {dimension_semantics = [], scalar_prefetch = 0 : i64, scratch_operands = 0 : i64, tpu.core_type = #tpu.core_type<tc>} {
    %c0 = arith.constant 0 : index
    %c0_0 = arith.constant 0 : index
    %0 = vector.load %arg0[%c0, %c0_0] : memref<1x32xi32, #tpu.memory_space<vmem>>, vector<1x32xi32>
    %c0_1 = arith.constant 0 : index
    %c0_2 = arith.constant 0 : index
    %1 = vector.load %arg1[%c0_1, %c0_2] : memref<32x1xi32, #tpu.memory_space<vmem>>, vector<32x1xi32>
    %2 = tpu.iota {dimensions = array<i32: 0>} : vector<16x32xi32>
    %3 = vector.broadcast %0 : vector<1x32xi32> to vector<16x32xi32>
    %4 = arith.cmpi eq, %2, %3 : vector<16x32xi32>
    %5 = arith.extui %4 : vector<16x32xi1> to vector<16x32xi32>
    %6 = arith.sitofp %5 : vector<16x32xi32> to vector<16x32xf32>
    %7 = arith.truncf %6 : vector<16x32xf32> to vector<16x32xbf16>
    %8 = tpu.iota {dimensions = array<i32: 1>} : vector<32x16xi32>
    %9 = vector.broadcast %1 : vector<32x1xi32> to vector<32x16xi32>
    %10 = arith.cmpi eq, %9, %8 : vector<32x16xi32>
    %11 = arith.extui %10 : vector<32x16xi1> to vector<32x16xi32>
    %12 = arith.sitofp %11 : vector<32x16xi32> to vector<32x16xf32>
    %13 = arith.truncf %12 : vector<32x16xf32> to vector<32x16xbf16>
    %cst = arith.constant dense<0.000000e+00> : vector<16x16xf32>
    %14 = tpu.matmul %7, %13, %cst {dimension_numbers = #tpu.dot_dimension_numbers<[1], [0], [0], [1], [0, 0, 1, 1], [], []>} : vector<16x32xbf16>, vector<32x16xbf16>, vector<16x16xf32> -> vector<16x16xf32>
    %15 = tpu.iota {dimensions = array<i32: 0>} : vector<16x16xi32>
    %16 = tpu.iota {dimensions = array<i32: 1>} : vector<16x16xi32>
    %17 = arith.cmpi eq, %15, %16 : vector<16x16xi32>
    %18 = arith.extui %17 : vector<16x16xi1> to vector<16x16xi32>
    %19 = arith.sitofp %18 : vector<16x16xi32> to vector<16x16xf32>
    %cst_3 = arith.constant 5.000000e-01 : f32
    %20 = vector.broadcast %cst_3 : f32 to vector<16x16xf32>
    %21 = arith.cmpf ogt, %14, %20 : vector<16x16xf32>
    %cst_4 = arith.constant 1.000000e+00 : f32
    %cst_5 = arith.constant 0.000000e+00 : f32
    %22 = vector.broadcast %cst_4 : f32 to vector<16x16xf32>
    %23 = vector.broadcast %cst_5 : f32 to vector<16x16xf32>
    %24 = arith.select %21, %22, %23 : vector<16x16xi1>, vector<16x16xf32>
    %25 = arith.addf %24, %19 : vector<16x16xf32>
    %cst_6 = arith.constant dense<0.000000e+00> : vector<16xf32>
    %26 = vector.multi_reduction <add>, %25, %cst_6 [1] : vector<16x16xf32> to vector<16xf32>
    %27 = vector.shape_cast %26 : vector<16xf32> to vector<16x1xf32>
    %cst_7 = arith.constant 0.000000e+00 : f32
    %28 = vector.broadcast %cst_7 : f32 to vector<16x1xf32>
    %29 = arith.cmpf ogt, %27, %28 : vector<16x1xf32>
    %cst_8 = arith.constant 1.000000e+00 : f32
    %30 = vector.broadcast %cst_8 : f32 to vector<16x1xf32>
    %31 = arith.select %29, %27, %30 : vector<16x1xi1>, vector<16x1xf32>
    %32 = vector.broadcast %31 : vector<16x1xf32> to vector<16x16xf32>
    %33 = arith.divf %25, %32 : vector<16x16xf32>
    %34 = arith.truncf %33 : vector<16x16xf32> to vector<16x16xbf16>
    %c0_9 = arith.constant 0 : index
    %c0_10 = arith.constant 0 : index
    %35 = vector.load %arg3[%c0_9, %c0_10] : memref<16x8xbf16, #tpu.memory_space<vmem>>, vector<16x8xbf16>
    %cst_11 = arith.constant dense<0.000000e+00> : vector<16x8xf32>
    %36 = tpu.matmul %34, %35, %cst_11 {dimension_numbers = #tpu.dot_dimension_numbers<[1], [0], [0], [1], [0, 0, 1, 1], [], []>} : vector<16x16xbf16>, vector<16x8xbf16>, vector<16x8xf32> -> vector<16x8xf32>
    %37 = arith.truncf %36 : vector<16x8xf32> to vector<16x8xbf16>
    %c0_12 = arith.constant 0 : index
    %c0_13 = arith.constant 0 : index
    %38 = vector.load %arg4[%c0_12, %c0_13] : memref<8x32xbf16, #tpu.memory_space<vmem>>, vector<8x32xbf16>
    %cst_14 = arith.constant dense<0.000000e+00> : vector<16x32xf32>
    %39 = tpu.matmul %37, %38, %cst_14 {dimension_numbers = #tpu.dot_dimension_numbers<[1], [0], [0], [1], [0, 0, 1, 1], [], []>} : vector<16x8xbf16>, vector<8x32xbf16>, vector<16x32xf32> -> vector<16x32xf32>
    %c0_15 = arith.constant 0 : index
    %c0_16 = arith.constant 0 : index
    %40 = vector.load %arg5[%c0_15, %c0_16] : memref<1x32xf32, #tpu.memory_space<vmem>>, vector<1x32xf32>
    %41 = vector.broadcast %40 : vector<1x32xf32> to vector<16x32xf32>
    %42 = arith.addf %39, %41 : vector<16x32xf32>
    %cst_17 = arith.constant 0.000000e+00 : f32
    %43 = vector.broadcast %cst_17 : f32 to vector<16x32xf32>
    %44 = arith.maximumf %42, %43 : vector<16x32xf32>
    %45 = arith.truncf %44 : vector<16x32xf32> to vector<16x32xbf16>
    %cst_18 = arith.constant dense<0.000000e+00> : vector<16x32xf32>
    %46 = tpu.matmul %34, %45, %cst_18 {dimension_numbers = #tpu.dot_dimension_numbers<[1], [0], [0], [1], [0, 0, 1, 1], [], []>} : vector<16x16xbf16>, vector<16x32xbf16>, vector<16x32xf32> -> vector<16x32xf32>
    %47 = arith.truncf %46 : vector<16x32xf32> to vector<16x32xbf16>
    %c0_19 = arith.constant 0 : index
    %c0_20 = arith.constant 0 : index
    %48 = vector.load %arg6[%c0_19, %c0_20] : memref<32x32xbf16, #tpu.memory_space<vmem>>, vector<32x32xbf16>
    %cst_21 = arith.constant dense<0.000000e+00> : vector<16x32xf32>
    %49 = tpu.matmul %47, %48, %cst_21 {dimension_numbers = #tpu.dot_dimension_numbers<[1], [0], [0], [1], [0, 0, 1, 1], [], []>} : vector<16x32xbf16>, vector<32x32xbf16>, vector<16x32xf32> -> vector<16x32xf32>
    %c0_22 = arith.constant 0 : index
    %c0_23 = arith.constant 0 : index
    %50 = vector.load %arg7[%c0_22, %c0_23] : memref<1x32xf32, #tpu.memory_space<vmem>>, vector<1x32xf32>
    %51 = vector.broadcast %50 : vector<1x32xf32> to vector<16x32xf32>
    %52 = arith.addf %49, %51 : vector<16x32xf32>
    %53 = arith.truncf %52 : vector<16x32xf32> to vector<16x32xbf16>
    %c0_24 = arith.constant 0 : index
    %c0_25 = arith.constant 0 : index
    %54 = vector.load %arg8[%c0_24, %c0_25] : memref<32x32xbf16, #tpu.memory_space<vmem>>, vector<32x32xbf16>
    %cst_26 = arith.constant dense<0.000000e+00> : vector<16x32xf32>
    %55 = tpu.matmul %53, %54, %cst_26 {dimension_numbers = #tpu.dot_dimension_numbers<[1], [0], [0], [1], [0, 0, 1, 1], [], []>} : vector<16x32xbf16>, vector<32x32xbf16>, vector<16x32xf32> -> vector<16x32xf32>
    %c0_27 = arith.constant 0 : index
    %c0_28 = arith.constant 0 : index
    %56 = vector.load %arg9[%c0_27, %c0_28] : memref<1x32xf32, #tpu.memory_space<vmem>>, vector<1x32xf32>
    %57 = vector.broadcast %56 : vector<1x32xf32> to vector<16x32xf32>
    %58 = arith.addf %55, %57 : vector<16x32xf32>
    %cst_29 = arith.constant 0.000000e+00 : f32
    %59 = vector.broadcast %cst_29 : f32 to vector<16x32xf32>
    %60 = arith.maximumf %58, %59 : vector<16x32xf32>
    %61 = arith.truncf %60 : vector<16x32xf32> to vector<16x32xbf16>
    %c0_30 = arith.constant 0 : index
    %c0_31 = arith.constant 0 : index
    %62 = vector.load %arg10[%c0_30, %c0_31] : memref<32x128xbf16, #tpu.memory_space<vmem>>, vector<32x128xbf16>
    %cst_32 = arith.constant dense<0.000000e+00> : vector<16x128xf32>
    %63 = tpu.matmul %61, %62, %cst_32 {dimension_numbers = #tpu.dot_dimension_numbers<[1], [0], [0], [1], [0, 0, 1, 1], [], []>} : vector<16x32xbf16>, vector<32x128xbf16>, vector<16x128xf32> -> vector<16x128xf32>
    %c0_33 = arith.constant 0 : index
    %c0_34 = arith.constant 0 : index
    %64 = vector.load %arg11[%c0_33, %c0_34] : memref<1x128xf32, #tpu.memory_space<vmem>>, vector<1x128xf32>
    %65 = vector.broadcast %64 : vector<1x128xf32> to vector<16x128xf32>
    %66 = arith.addf %63, %65 : vector<16x128xf32>
    %cst_35 = arith.constant dense<0.000000e+00> : vector<32xf32>
    %67 = vector.multi_reduction <add>, %52, %cst_35 [0] : vector<16x32xf32> to vector<32xf32>
    %68 = vector.shape_cast %67 : vector<32xf32> to vector<1x32xf32>
    %cst_36 = arith.constant 1.600000e+01 : f32
    %69 = vector.broadcast %cst_36 : f32 to vector<1x32xf32>
    %70 = arith.divf %68, %69 : vector<1x32xf32>
    %71 = arith.truncf %70 : vector<1x32xf32> to vector<1x32xbf16>
    %c0_37 = arith.constant 0 : index
    %c0_38 = arith.constant 0 : index
    %72 = vector.load %arg12[%c0_37, %c0_38] : memref<32x32xbf16, #tpu.memory_space<vmem>>, vector<32x32xbf16>
    %cst_39 = arith.constant dense<0.000000e+00> : vector<1x32xf32>
    %73 = tpu.matmul %71, %72, %cst_39 {dimension_numbers = #tpu.dot_dimension_numbers<[1], [0], [0], [1], [0, 0, 1, 1], [], []>} : vector<1x32xbf16>, vector<32x32xbf16>, vector<1x32xf32> -> vector<1x32xf32>
    %c0_40 = arith.constant 0 : index
    %c0_41 = arith.constant 0 : index
    %74 = vector.load %arg13[%c0_40, %c0_41] : memref<1x32xf32, #tpu.memory_space<vmem>>, vector<1x32xf32>
    %75 = arith.addf %73, %74 : vector<1x32xf32>
    %cst_42 = arith.constant 0.000000e+00 : f32
    %76 = vector.broadcast %cst_42 : f32 to vector<1x32xf32>
    %77 = arith.maximumf %75, %76 : vector<1x32xf32>
    %78 = arith.truncf %77 : vector<1x32xf32> to vector<1x32xbf16>
    %c0_43 = arith.constant 0 : index
    %c0_44 = arith.constant 0 : index
    %79 = vector.load %arg14[%c0_43, %c0_44] : memref<32x1xbf16, #tpu.memory_space<vmem>>, vector<32x1xbf16>
    %cst_45 = arith.constant dense<0.000000e+00> : vector<1x1xf32>
    %80 = tpu.matmul %78, %79, %cst_45 {dimension_numbers = #tpu.dot_dimension_numbers<[1], [0], [0], [1], [0, 0, 1, 1], [], []>} : vector<1x32xbf16>, vector<32x1xbf16>, vector<1x1xf32> -> vector<1x1xf32>
    %c0_46 = arith.constant 0 : index
    %c0_47 = arith.constant 0 : index
    %81 = vector.load %arg15[%c0_46, %c0_47] : memref<1x1xf32, #tpu.memory_space<vmem>>, vector<1x1xf32>
    %82 = arith.addf %80, %81 : vector<1x1xf32>
    %c0_48 = arith.constant 0 : index
    %c0_49 = arith.constant 0 : index
    %83 = vector.load %arg2[%c0_48, %c0_49] : memref<16x1xi32, #tpu.memory_space<vmem>>, vector<16x1xi32>
    %84 = tpu.iota {dimensions = array<i32: 1>} : vector<16x4xi32>
    %85 = vector.broadcast %83 : vector<16x1xi32> to vector<16x4xi32>
    %86 = arith.cmpi eq, %85, %84 : vector<16x4xi32>
    %87 = arith.extui %86 : vector<16x4xi1> to vector<16x4xi32>
    %88 = arith.sitofp %87 : vector<16x4xi32> to vector<16x4xf32>
    %cst_50 = arith.constant dense<0.000000e+00> : vector<4xf32>
    %89 = vector.multi_reduction <add>, %88, %cst_50 [0] : vector<16x4xf32> to vector<4xf32>
    %90 = vector.shape_cast %89 : vector<4xf32> to vector<1x4xf32>
    %91 = vector.broadcast %90 : vector<1x4xf32> to vector<16x4xf32>
    %92 = arith.mulf %88, %91 : vector<16x4xf32>
    %cst_51 = arith.constant dense<0.000000e+00> : vector<16xf32>
    %93 = vector.multi_reduction <add>, %92, %cst_51 [1] : vector<16x4xf32> to vector<16xf32>
    %94 = vector.shape_cast %93 : vector<16xf32> to vector<16x1xf32>
    %cst_52 = arith.constant 1.000000e+00 : f32
    %95 = vector.broadcast %cst_52 : f32 to vector<16x1xf32>
    %96 = arith.cmpf ole, %94, %95 : vector<16x1xf32>
    %97 = tpu.iota {dimensions = array<i32: 1>} : vector<16x128xi32>
    %c1_i32 = arith.constant 1 : i32
    %98 = vector.broadcast %c1_i32 : i32 to vector<16x128xi32>
    %99 = arith.cmpi sge, %97, %98 : vector<16x128xi32>
    %c4_i32 = arith.constant 4 : i32
    %100 = vector.broadcast %c4_i32 : i32 to vector<16x128xi32>
    %101 = arith.cmpi sle, %97, %100 : vector<16x128xi32>
    %102 = arith.andi %99, %101 : vector<16x128xi1>
    %c1_i32_53 = arith.constant 1 : i32
    %103 = vector.broadcast %c1_i32_53 : i32 to vector<16x128xi32>
    %104 = arith.subi %97, %103 : vector<16x128xi32>
    %105 = vector.broadcast %83 : vector<16x1xi32> to vector<16x128xi32>
    %106 = arith.cmpi ne, %104, %105 : vector<16x128xi32>
    %107 = vector.broadcast %96 : vector<16x1xi1> to vector<16x128xi1>
    %108 = arith.andi %107, %106 : vector<16x128xi1>
    %109 = arith.andi %102, %108 : vector<16x128xi1>
    %cst_54 = arith.constant 0xFF800000 : f32
    %110 = vector.broadcast %cst_54 : f32 to vector<16x128xf32>
    %111 = arith.select %109, %110, %66 : vector<16x128xi1>, vector<16x128xf32>
    %c5_i32 = arith.constant 5 : i32
    %112 = vector.broadcast %c5_i32 : i32 to vector<16x128xi32>
    %113 = arith.cmpi eq, %97, %112 : vector<16x128xi32>
    %cst_55 = arith.constant 0.000000e+00 : f32
    %114 = vector.shape_cast %82 : vector<1x1xf32> to vector<1x1xf32>
    %115 = vector.broadcast %114 : vector<1x1xf32> to vector<16x128xf32>
    %116 = vector.broadcast %cst_55 : f32 to vector<16x128xf32>
    %117 = arith.select %113, %115, %116 : vector<16x128xi1>, vector<16x128xf32>
    %118 = arith.addf %111, %117 : vector<16x128xf32>
    %c0_56 = arith.constant 0 : index
    %c0_57 = arith.constant 0 : index
    %119 = vector.load %arg16[%c0_56, %c0_57] : memref<16x128xf32, #tpu.memory_space<vmem>>, vector<16x128xf32>
    tpu.vector_store %arg16[%c0_56, %c0_57], %118 {strides = array<i32>} : memref<16x128xf32, #tpu.memory_space<vmem>>, vector<16x128xf32>,
    return
  }
}

</mosaic_0001>

<llo_original>
// kernel: tpu_custom_call.1
$region0: #{tpu_custom_call.1}
  #allocation0 [shape = 'u32[]', space=smem, size = 0x4, offset = 0x4, fixed_abs, tag = 'smem constant byte address 0x4 - core index']
  #allocation1 [shape = 'u32[144,128]{1,0:T(1,128)}', space=vmem, size = 0x12000, scoped, tag = 'internal scratch']
  #allocation2 [shape = 'f32[1,1]{1,0:T(1,128)S(1)}', space=vmem, size = 0x200, scoped, tag = 'scoped memory for tpu_custom_call.1']
  %s0 = inlined_call_operand.vmem [shape: s32[1,32], index: 0, kind: input, shape index: {}]
  %s1 = inlined_call_operand.vmem [shape: s32[32,1], index: 1, kind: input, shape index: {}]
  %s2 = inlined_call_operand.vmem [shape: s32[16,1], index: 2, kind: input, shape index: {}]
  %s3 = inlined_call_operand.vmem [shape: bf16[16,8], index: 3, kind: input, shape index: {}]
  %s4 = inlined_call_operand.vmem [shape: bf16[8,32], index: 4, kind: input, shape index: {}]
  %s5 = inlined_call_operand.vmem [shape: f32[1,32], index: 5, kind: input, shape index: {}]
  %s6 = inlined_call_operand.vmem [shape: bf16[32,32], index: 6, kind: input, shape index: {}]
  %s7 = inlined_call_operand.vmem [shape: f32[1,32], index: 7, kind: input, shape index: {}]
  %s8 = inlined_call_operand.vmem [shape: bf16[32,32], index: 8, kind: input, shape index: {}]
  %s9 = inlined_call_operand.vmem [shape: f32[1,32], index: 9, kind: input, shape index: {}]
  %s10 = inlined_call_operand.vmem [shape: bf16[32,128], index: 10, kind: input, shape index: {}]
  %s11 = inlined_call_operand.vmem [shape: f32[1,128], index: 11, kind: input, shape index: {}]
  %s12 = inlined_call_operand.vmem [shape: bf16[32,32], index: 12, kind: input, shape index: {}]
  %s13 = inlined_call_operand.vmem [shape: f32[1,32], index: 13, kind: input, shape index: {}]
  %s14 = inlined_call_operand.vmem [shape: bf16[32,1], index: 14, kind: input, shape index: {}]
  %s15 = inlined_call_operand.<no memory space> [shape: f32[1,1], index: 15, kind: input, shape index: {}]
  %s16 = inlined_call_operand.hbm [shape: f32[16,128], index: 16, kind: output, shape index: {}]
  %s17 = sld [smem:[#allocation0]]
  $region74: #{tpu_custom_call.1} parent=0
    _
  %s19 = ssub.s32 1, %s17
  %s20 = scalar_select 0, %s19, %s17
  %v21 = vstv %s15
  %22 = vst [vmem:[#allocation2] sm:$0x1] %v21
  $region1: #{tpu_custom_call.1} parent=0
    #allocation3 [shape = 'u8[8192]{0}', space=vmem, size = 0x2000, scoped, tag = 'output window, operand 0, single buffered']
    #allocation4 [shape = 's32[1]{0}', space=sflag, size = 0x4, scoped, tag = 'scoped memory for tpu_custom_call.1']
    %23 = vsyncpa [#allocation4], 0
    // Predicated region
    $region2: #{tpu_custom_call.1} parent=1 // pred_check
      _
    $region3: #{tpu_custom_call.1} parent=1 // pred_check_branch
      %25 = sbr.rel (0) target = $region5
    $region4: #{tpu_custom_call.1} parent=1 // pred_region
      _
    $region5: #{tpu_custom_call.1} parent=1 // pred_fallthru
      _
    // Predicated region
    $region6: #{tpu_custom_call.1} parent=1 // pred_check
      _
    $region7: #{tpu_custom_call.1} parent=1 // pred_check_branch
      %27 = sbr.rel (0) target = $region9
    $region8: #{tpu_custom_call.1} parent=1 // pred_region
      _
    $region9: #{tpu_custom_call.1} parent=1 // pred_fallthru
      _
    // Predicated region
    $region10: #{tpu_custom_call.1} parent=1 // pred_check
      _
    $region11: #{tpu_custom_call.1} parent=1 // pred_check_branch
      %29 = sbr.rel (0) target = $region13
    $region12: #{tpu_custom_call.1} parent=1 // pred_region
      _
    $region13: #{tpu_custom_call.1} parent=1 // pred_fallthru
      _
    // Predicated region
    $region14: #{tpu_custom_call.1} parent=1 // pred_check
      _
    $region15: #{tpu_custom_call.1} parent=1 // pred_check_branch
      %31 = sbr.rel (0) target = $region17
    $region16: #{tpu_custom_call.1} parent=1 // pred_region
      _
    $region17: #{tpu_custom_call.1} parent=1 // pred_fallthru
      _
    // Predicated region
    $region18: #{tpu_custom_call.1} parent=1 // pred_check
      _
    $region19: #{tpu_custom_call.1} parent=1 // pred_check_branch
      %33 = sbr.rel (0) target = $region21
    $region20: #{tpu_custom_call.1} parent=1 // pred_region
      _
    $region21: #{tpu_custom_call.1} parent=1 // pred_fallthru
      _
    // Predicated region
    $region22: #{tpu_custom_call.1} parent=1 // pred_check
      _
    $region23: #{tpu_custom_call.1} parent=1 // pred_check_branch
      %35 = sbr.rel (0) target = $region25
    $region24: #{tpu_custom_call.1} parent=1 // pred_region
      _
    $region25: #{tpu_custom_call.1} parent=1 // pred_fallthru
      _
    // Predicated region
    $region26: #{tpu_custom_call.1} parent=1 // pred_check
      _
    $region27: #{tpu_custom_call.1} parent=1 // pred_check_branch
      %37 = sbr.rel (0) target = $region29
    $region28: #{tpu_custom_call.1} parent=1 // pred_region
      _
    $region29: #{tpu_custom_call.1} parent=1 // pred_fallthru
      _
    // Predicated region
    $region30: #{tpu_custom_call.1} parent=1 // pred_check
      _
    $region31: #{tpu_custom_call.1} parent=1 // pred_check_branch
      %39 = sbr.rel (0) target = $region33
    $region32: #{tpu_custom_call.1} parent=1 // pred_region
      _
    $region33: #{tpu_custom_call.1} parent=1 // pred_fallthru
      _
    // Predicated region
    $region34: #{tpu_custom_call.1} parent=1 // pred_check
      _
    $region35: #{tpu_custom_call.1} parent=1 // pred_check_branch
      %41 = sbr.rel (0) target = $region37
    $region36: #{tpu_custom_call.1} parent=1 // pred_region
      _
    $region37: #{tpu_custom_call.1} parent=1 // pred_fallthru
      _
    // Predicated region
    $region38: #{tpu_custom_call.1} parent=1 // pred_check
      _
    $region39: #{tpu_custom_call.1} parent=1 // pred_check_branch
      %43 = sbr.rel (0) target = $region41
    $region40: #{tpu_custom_call.1} parent=1 // pred_region
      _
    $region41: #{tpu_custom_call.1} parent=1 // pred_fallthru
      _
    // Predicated region
    $region42: #{tpu_custom_call.1} parent=1 // pred_check
      _
    $region43: #{tpu_custom_call.1} parent=1 // pred_check_branch
      %45 = sbr.rel (0) target = $region45
    $region44: #{tpu_custom_call.1} parent=1 // pred_region
      _
    $region45: #{tpu_custom_call.1} parent=1 // pred_fallthru
      _
    // Predicated region
    $region46: #{tpu_custom_call.1} parent=1 // pred_check
      _
    $region47: #{tpu_custom_call.1} parent=1 // pred_check_branch
      %47 = sbr.rel (0) target = $region49
    $region48: #{tpu_custom_call.1} parent=1 // pred_region
      _
    $region49: #{tpu_custom_call.1} parent=1 // pred_fallthru
      _
    // Predicated region
    $region50: #{tpu_custom_call.1} parent=1 // pred_check
      _
    $region51: #{tpu_custom_call.1} parent=1 // pred_check_branch
      %49 = sbr.rel (0) target = $region53
    $region52: #{tpu_custom_call.1} parent=1 // pred_region
      _
    $region53: #{tpu_custom_call.1} parent=1 // pred_fallthru
      _
    // Predicated region
    $region54: #{tpu_custom_call.1} parent=1 // pred_check
      _
    $region55: #{tpu_custom_call.1} parent=1 // pred_check_branch
      %51 = sbr.rel (0) target = $region57
    $region56: #{tpu_custom_call.1} parent=1 // pred_region
      _
    $region57: #{tpu_custom_call.1} parent=1 // pred_fallthru
      _
    // Predicated region
    $region58: #{tpu_custom_call.1} parent=1 // pred_check
      _
    $region59: #{tpu_custom_call.1} parent=1 // pred_check_branch
      %53 = sbr.rel (0) target = $region61
    $region60: #{tpu_custom_call.1} parent=1 // pred_region
      _
    $region61: #{tpu_custom_call.1} parent=1 // pred_fallthru
      _
    // Predicated region
    $region62: #{tpu_custom_call.1} parent=1 // pred_check
      _
    $region63: #{tpu_custom_call.1} parent=1 // pred_check_branch
      %55 = sbr.rel (0) target = $region65
    $region64: #{tpu_custom_call.1} parent=1 // pred_region
      _
    $region65: #{tpu_custom_call.1} parent=1 // pred_fallthru
      _
    %v57 = vld [vmem:[%s0] sm:$0x1]
    %v58 = vld [vmem:[%s1] sm:$0xff]
    %v59 = vld [vmem:[%s1 + $0x8] sm:$0xff]
    %v60 = vld [vmem:[%s1 + $0x10] sm:$0xff]
    %v61 = vld [vmem:[%s1 + $0x18] sm:$0xff]
    %v62 = vlaneseq
    %v63 = vshrl.u32 %v62, 7
    %v64 = vadd.s32 %v63, 8
    %v65 = vlaneseq
    %v66 = vshrl.u32 %v65, 7
    %v67 = vsub.s32 0, %v66
    %v68 = vrot.slane %v57, %v67
    %vm69 = vcmp.eq.s32.totalorder %v63, %v68
    %vm70 = vcmp.eq.s32.totalorder %v64, %v68
    %v71 = vsel %vm69, 1, 0
    %v72 = vsel %vm70, 1, 0
    %v73 = vcvt.s32.f32 %v71
    %v74 = vcvt.s32.f32 %v72
    %v75 = vpack.c.bf16 %v74, %v73
    %v76 = vlaneseq
    %v77 = vand.u32 %v76, 127
    %78 = vset.pattern.permute.xlu0 0
    %79 = vperm.xlu0 %78, %v58
    %v80 = vpop.permute.xlu0 %79
    %81 = vset.pattern.permute.xlu0 0
    %82 = vperm.xlu0 %81, %v59
    %v83 = vpop.permute.xlu0 %82
    %84 = vset.pattern.permute.xlu0 0
    %85 = vperm.xlu0 %84, %v60
    %v86 = vpop.permute.xlu0 %85
    %87 = vset.pattern.permute.xlu0 0
    %88 = vperm.xlu0 %87, %v61
    %v89 = vpop.permute.xlu0 %88
    %vm90 = vcmp.eq.s32.totalorder %v80, %v77
    %vm91 = vcmp.eq.s32.totalorder %v83, %v77
    %vm92 = vcmp.eq.s32.totalorder %v86, %v77
    %vm93 = vcmp.eq.s32.totalorder %v89, %v77
    %v94 = vsel %vm90, 1, 0
    %v95 = vsel %vm91, 1, 0
    %v96 = vsel %vm92, 1, 0
    %v97 = vsel %vm93, 1, 0
    %v98 = vcvt.s32.f32 %v94
    %v99 = vcvt.s32.f32 %v95
    %v100 = vcvt.s32.f32 %v96
    %v101 = vcvt.s32.f32 %v97
    %v102 = vpack.c.bf16 %v99, %v98
    %v103 = vpack.c.bf16 %v101, %v100
    %vm104 = vcmask 261120
    %v106 = vsel %vm104, %v75, 0
    %108 = vmatprep.subr.bf16.mxu0 0
    %109 = vmatpush1.bf16.msra.mxu0 %v102
    %110 = vmatprep.subr.bf16.mxu0 0
    %111 = vmatpush1.bf16.msra.mxu0 %v103
    %112 = vmatprep.subr.bf16.mxu0 0
    %113 = vmatpush1.bf16.msra.mxu0 0
    %114 = vmatprep.subr.bf16.mxu0 0
    %115 = vmatpush1.bf16.msra.mxu0 0
    %116 = vmatprep.subr.bf16.mxu0 0
    %117 = vmatpush1.bf16.msra.mxu0 0
    %118 = vmatprep.subr.bf16.mxu0 0
    %119 = vmatpush1.bf16.msra.mxu0 0
    %120 = vmatprep.subr.bf16.mxu0 0
    %121 = vmatpush1.bf16.msra.mxu0 0
    %122 = vmatprep.subr.bf16.mxu0 0
    %123 = vmatpush1.bf16.msra.mxu0 0
    %124 = vmatprep.subr.bf16.mxu0 0
    %125 = vmatpush1.bf16.msra.mxu0 0
    %126 = vmatprep.subr.bf16.mxu0 0
    %127 = vmatpush1.bf16.msra.mxu0 0
    %128 = vmatprep.subr.bf16.mxu0 0
    %129 = vmatpush1.bf16.msra.mxu0 0
    %130 = vmatprep.subr.bf16.mxu0 0
    %131 = vmatpush1.bf16.msra.mxu0 0
    %132 = vmatprep.subr.bf16.mxu0 0
    %133 = vmatpush1.bf16.msra.mxu0 0
    %134 = vmatprep.subr.bf16.mxu0 0
    %135 = vmatpush1.bf16.msra.mxu0 0
    %136 = vmatprep.subr.bf16.mxu0 0
    %137 = vmatpush1.bf16.msra.mxu0 0
    %138 = vmatprep.subr.bf16.mxu0 0
    %139 = vmatpush1.bf16.msra.mxu0 0
    %140 = vmatprep.mubr.bf16.mxu0 0
    %141 = vmatmul.mubr.bf16.gmra.mrb[0].mxu0 %v106
    %v142 = vpop.f32.mrb[0].mxu0
    %v143 = vadd.f32 0.0, %v142
    %v144 = vpop.f32.mrb[0].mxu0
    %v145 = vpop.f32.mrb[0].mxu0
    %v146 = vadd.f32 0.0, %v145
    %v147 = vpop.f32.mrb[0].mxu0
    %148 = vdwg.mxu0
    %vm149 = vcmp.eq.s32.totalorder %v63, %v77
    %vm150 = vcmp.eq.s32.totalorder %v64, %v77
    %v151 = vsel %vm149, 1, 0
    %v152 = vsel %vm150, 1, 0
    %v153 = vcvt.s32.f32 %v151
    %v154 = vcvt.s32.f32 %v152
    %vm155 = vcmp.gt.f32.partialorder %v143, 0.5
    %vm156 = vcmp.gt.f32.partialorder %v146, 0.5
    %v157 = vsel %vm155, 1.0, 0.0
    %v158 = vsel %vm156, 1.0, 0.0
    %v159 = vadd.f32 %v157, %v153
    %v160 = vadd.f32 %v158, %v154
    %vm161 = vcmask 130048
    %v162 = vsel %vm161, %v159, 0.0
    %163 = vadd.xlane.f32.xlu0 %v162
    %v164 = vpop.xlane.xlu0 %163
    %v165 = vsel %vm161, %v160, 0.0
    %166 = vadd.xlane.f32.xlu0 %v165
    %v167 = vpop.xlane.xlu0 %166
    %vm168 = vcmp.gt.f32.partialorder %v164, 0.0
    %vm169 = vcmp.gt.f32.partialorder %v167, 0.0
    %v170 = vsel %vm168, %v164, 1.0
    %v171 = vsel %vm169, %v167, 1.0
    %v172 = vrcp.pop %v170
    %v173 = vmul.f32 %v159, %v172
    %v174 = vrcp.pop %v171
    %v175 = vmul.f32 %v160, %v174
    %v176 = vpack.c.bf16 %v175, %v173
    %v177 = vld [vmem:[%s3] sm:$0xf]
    %v178 = vld [vmem:[%s3 + $0x4] sm:$0xf]
    %v181 = vunpack.c.l.b16 %v177
    %v182 = vunpack.c.l.b16 %v178
    %v183 = vpack.c.b16 %v182, %v181
    %v186 = vsel %vm161, %v176, 0
    %188 = vmatprep.subr.bf16.mxu0 0
    %189 = vmatpush1.bf16.msra.mxu0 %v183
    %190 = vmatprep.subr.bf16.mxu0 0
    %191 = vmatpush1.bf16.msra.mxu0 0
    %192 = vmatprep.subr.bf16.mxu0 0
    %193 = vmatpush1.bf16.msra.mxu0 0
    %194 = vmatprep.subr.bf16.mxu0 0
    %195 = vmatpush1.bf16.msra.mxu0 0
    %196 = vmatprep.subr.bf16.mxu0 0
    %197 = vmatpush1.bf16.msra.mxu0 0
    %198 = vmatprep.subr.bf16.mxu0 0
    %199 = vmatpush1.bf16.msra.mxu0 0
    %200 = vmatprep.subr.bf16.mxu0 0
    %201 = vmatpush1.bf16.msra.mxu0 0
    %202 = vmatprep.subr.bf16.mxu0 0
    %203 = vmatpush1.bf16.msra.mxu0 0
    %204 = vmatprep.subr.bf16.mxu0 0
    %205 = vmatpush1.bf16.msra.mxu0 0
    %206 = vmatprep.subr.bf16.mxu0 0
    %207 = vmatpush1.bf16.msra.mxu0 0
    %208 = vmatprep.subr.bf16.mxu0 0
    %209 = vmatpush1.bf16.msra.mxu0 0
    %210 = vmatprep.subr.bf16.mxu0 0
    %211 = vmatpush1.bf16.msra.mxu0 0
    %212 = vmatprep.subr.bf16.mxu0 0
    %213 = vmatpush1.bf16.msra.mxu0 0
    %214 = vmatprep.subr.bf16.mxu0 0
    %215 = vmatpush1.bf16.msra.mxu0 0
    %216 = vmatprep.subr.bf16.mxu0 0
    %217 = vmatpush1.bf16.msra.mxu0 0
    %218 = vmatprep.subr.bf16.mxu0 0
    %219 = vmatpush1.bf16.msra.mxu0 0
    %220 = vmatprep.mubr.bf16.mxu0 0
    %221 = vmatmul.mubr.bf16.gmra.mrb[0].mxu0 %v186
    %v222 = vpop.f32.mrb[0].mxu0
    %v223 = vadd.f32 0.0, %v222
    %v224 = vpop.f32.mrb[0].mxu0
    %v225 = vpop.f32.mrb[0].mxu0
    %v226 = vadd.f32 0.0, %v225
    %v227 = vpop.f32.mrb[0].mxu0
    %228 = vdwg.mxu0
    %v229 = vpack.c.bf16 %v226, %v223
    %v230 = vld [vmem:[%s4] sm:$0xf]
    %v231 = vld [vmem:[%s5] sm:$0x1]
    %v233 = vlaneseq
    %v234 = vshrl.u32 %v233, 7
    %v235 = vsub.s32 0, %v234
    %v236 = vrot.slane %v231, %v235
    %vm238 = vcmask 64512
    %v240 = vsel %vm238, %v229, 0
    %vm242 = vcmask 1043456
    %v244 = vsel %vm242, %v230, 0
    %246 = vmatprep.subr.bf16.mxu0 0
    %247 = vmatpush1.bf16.msra.mxu0 %v244
    %248 = vmatprep.subr.bf16.mxu0 0
    %249 = vmatpush1.bf16.msra.mxu0 0
    %250 = vmatprep.subr.bf16.mxu0 0
    %251 = vmatpush1.bf16.msra.mxu0 0
    %252 = vmatprep.subr.bf16.mxu0 0
    %253 = vmatpush1.bf16.msra.mxu0 0
    %254 = vmatprep.subr.bf16.mxu0 0
    %255 = vmatpush1.bf16.msra.mxu0 0
    %256 = vmatprep.subr.bf16.mxu0 0
    %257 = vmatpush1.bf16.msra.mxu0 0
    %258 = vmatprep.subr.bf16.mxu0 0
    %259 = vmatpush1.bf16.msra.mxu0 0
    %260 = vmatprep.subr.bf16.mxu0 0
    %261 = vmatpush1.bf16.msra.mxu0 0
    %262 = vmatprep.subr.bf16.mxu0 0
    %263 = vmatpush1.bf16.msra.mxu0 0
    %264 = vmatprep.subr.bf16.mxu0 0
    %265 = vmatpush1.bf16.msra.mxu0 0
    %266 = vmatprep.subr.bf16.mxu0 0
    %267 = vmatpush1.bf16.msra.mxu0 0
    %268 = vmatprep.subr.bf16.mxu0 0
    %269 = vmatpush1.bf16.msra.mxu0 0
    %270 = vmatprep.subr.bf16.mxu0 0
    %271 = vmatpush1.bf16.msra.mxu0 0
    %272 = vmatprep.subr.bf16.mxu0 0
    %273 = vmatpush1.bf16.msra.mxu0 0
    %274 = vmatprep.subr.bf16.mxu0 0
    %275 = vmatpush1.bf16.msra.mxu0 0
    %276 = vmatprep.subr.bf16.mxu0 0
    %277 = vmatpush1.bf16.msra.mxu0 0
    %278 = vmatprep.mubr.bf16.mxu0 0
    %279 = vmatmul.mubr.bf16.gmra.mrb[0].mxu0 %v240
    %v280 = vpop.f32.mrb[0].mxu0
    %v281 = vadd.f32 %v236, %v280
    %v282 = vpop.f32.mrb[0].mxu0
    %v283 = vpop.f32.mrb[0].mxu0
    %v284 = vadd.f32 %v236, %v283
    %v285 = vpop.f32.mrb[0].mxu0
    %286 = vdwg.mxu0
    %v287 = vmax.f32 %v281, 0.0
    %v288 = vmax.f32 %v284, 0.0
    %v289 = vpack.c.bf16 %v288, %v287
    %290 = vmatprep.subr.bf16.mxu0 0
    %291 = vmatpush1.bf16.msra.mxu0 %v289
    %292 = vmatprep.subr.bf16.mxu0 0
    %293 = vmatpush1.bf16.msra.mxu0 0
    %294 = vmatprep.subr.bf16.mxu0 0
    %295 = vmatpush1.bf16.msra.mxu0 0
    %296 = vmatprep.subr.bf16.mxu0 0
    %297 = vmatpush1.bf16.msra.mxu0 0
    %298 = vmatprep.subr.bf16.mxu0 0
    %299 = vmatpush1.bf16.msra.mxu0 0
    %300 = vmatprep.subr.bf16.mxu0 0
    %301 = vmatpush1.bf16.msra.mxu0 0
    %302 = vmatprep.subr.bf16.mxu0 0
    %303 = vmatpush1.bf16.msra.mxu0 0
    %304 = vmatprep.subr.bf16.mxu0 0
    %305 = vmatpush1.bf16.msra.mxu0 0
    %306 = vmatprep.subr.bf16.mxu0 0
    %307 = vmatpush1.bf16.msra.mxu0 0
    %308 = vmatprep.subr.bf16.mxu0 0
    %309 = vmatpush1.bf16.msra.mxu0 0
    %310 = vmatprep.subr.bf16.mxu0 0
    %311 = vmatpush1.bf16.msra.mxu0 0
    %312 = vmatprep.subr.bf16.mxu0 0
    %313 = vmatpush1.bf16.msra.mxu0 0
    %314 = vmatprep.subr.bf16.mxu0 0
    %315 = vmatpush1.bf16.msra.mxu0 0
    %316 = vmatprep.subr.bf16.mxu0 0
    %317 = vmatpush1.bf16.msra.mxu0 0
    %318 = vmatprep.subr.bf16.mxu0 0
    %319 = vmatpush1.bf16.msra.mxu0 0
    %320 = vmatprep.subr.bf16.mxu0 0
    %321 = vmatpush1.bf16.msra.mxu0 0
    %322 = vmatprep.mubr.bf16.mxu0 0
    %323 = vmatmul.mubr.bf16.gmra.mrb[0].mxu0 %v186
    %v324 = vpop.f32.mrb[0].mxu0
    %v325 = vadd.f32 0.0, %v324
    %v326 = vpop.f32.mrb[0].mxu0
    %v327 = vpop.f32.mrb[0].mxu0
    %v328 = vadd.f32 0.0, %v327
    %v329 = vpop.f32.mrb[0].mxu0
    %330 = vdwg.mxu0
    %v331 = vpack.c.bf16 %v328, %v325
    %v332 = vld [vmem:[%s6] sm:$0xf]
    %v333 = vld [vmem:[%s6 + $0x4] sm:$0xf]
    %v334 = vld [vmem:[%s6 + $0x8] sm:$0xf]
    %v335 = vld [vmem:[%s6 + $0xc] sm:$0xf]
    %v336 = vld [vmem:[%s7] sm:$0x1]
    %v338 = vlaneseq
    %v339 = vshrl.u32 %v338, 7
    %v340 = vsub.s32 0, %v339
    %v341 = vrot.slane %v336, %v340
    %v347 = vunpack.c.l.b16 %v332
    %v348 = vunpack.c.l.b16 %v333
    %v349 = vunpack.c.l.b16 %v334
    %v350 = vunpack.c.l.b16 %v335
    %v351 = vpack.c.b16 %v348, %v347
    %v352 = vpack.c.b16 %v350, %v349
    %v356 = vsel %vm104, %v331, 0
    %358 = vmatprep.subr.bf16.mxu0 0
    %359 = vmatpush1.bf16.msra.mxu0 %v351
    %360 = vmatprep.subr.bf16.mxu0 0
    %361 = vmatpush1.bf16.msra.mxu0 %v352
    %362 = vmatprep.subr.bf16.mxu0 0
    %363 = vmatpush1.bf16.msra.mxu0 0
    %364 = vmatprep.subr.bf16.mxu0 0
    %365 = vmatpush1.bf16.msra.mxu0 0
    %366 = vmatprep.subr.bf16.mxu0 0
    %367 = vmatpush1.bf16.msra.mxu0 0
    %368 = vmatprep.subr.bf16.mxu0 0
    %369 = vmatpush1.bf16.msra.mxu0 0
    %370 = vmatprep.subr.bf16.mxu0 0
    %371 = vmatpush1.bf16.msra.mxu0 0
    %372 = vmatprep.subr.bf16.mxu0 0
    %373 = vmatpush1.bf16.msra.mxu0 0
    %374 = vmatprep.subr.bf16.mxu0 0
    %375 = vmatpush1.bf16.msra.mxu0 0
    %376 = vmatprep.subr.bf16.mxu0 0
    %377 = vmatpush1.bf16.msra.mxu0 0
    %378 = vmatprep.subr.bf16.mxu0 0
    %379 = vmatpush1.bf16.msra.mxu0 0
    %380 = vmatprep.subr.bf16.mxu0 0
    %381 = vmatpush1.bf16.msra.mxu0 0
    %382 = vmatprep.subr.bf16.mxu0 0
    %383 = vmatpush1.bf16.msra.mxu0 0
    %384 = vmatprep.subr.bf16.mxu0 0
    %385 = vmatpush1.bf16.msra.mxu0 0
    %386 = vmatprep.subr.bf16.mxu0 0
    %387 = vmatpush1.bf16.msra.mxu0 0
    %388 = vmatprep.subr.bf16.mxu0 0
    %389 = vmatpush1.bf16.msra.mxu0 0
    %390 = vmatprep.mubr.bf16.mxu0 0
    %391 = vmatmul.mubr.bf16.gmra.mrb[0].mxu0 %v356
    %v392 = vpop.f32.mrb[0].mxu0
    %v393 = vadd.f32 %v341, %v392
    %v394 = vpop.f32.mrb[0].mxu0
    %v395 = vpop.f32.mrb[0].mxu0
    %v396 = vadd.f32 %v341, %v395
    %v397 = vpop.f32.mrb[0].mxu0
    %398 = vdwg.mxu0
    %v399 = vpack.c.bf16 %v396, %v393
    %v400 = vld [vmem:[%s8] sm:$0xf]
    %v401 = vld [vmem:[%s8 + $0x4] sm:$0xf]
    %v402 = vld [vmem:[%s8 + $0x8] sm:$0xf]
    %v403 = vld [vmem:[%s8 + $0xc] sm:$0xf]
    %v404 = vld [vmem:[%s9] sm:$0x1]
    %v406 = vlaneseq
    %v407 = vshrl.u32 %v406, 7
    %v408 = vsub.s32 0, %v407
    %v409 = vrot.slane %v404, %v408
    %v415 = vunpack.c.l.b16 %v400
    %v416 = vunpack.c.l.b16 %v401
    %v417 = vunpack.c.l.b16 %v402
    %v418 = vunpack.c.l.b16 %v403
    %v419 = vpack.c.b16 %v416, %v415
    %v420 = vpack.c.b16 %v418, %v417
    %v424 = vsel %vm104, %v399, 0
    %426 = vmatprep.subr.bf16.mxu0 0
    %427 = vmatpush1.bf16.msra.mxu0 %v419
    %428 = vmatprep.subr.bf16.mxu0 0
    %429 = vmatpush1.bf16.msra.mxu0 %v420
    %430 = vmatprep.subr.bf16.mxu0 0
    %431 = vmatpush1.bf16.msra.mxu0 0
    %432 = vmatprep.subr.bf16.mxu0 0
    %433 = vmatpush1.bf16.msra.mxu0 0
    %434 = vmatprep.subr.bf16.mxu0 0
    %435 = vmatpush1.bf16.msra.mxu0 0
    %436 = vmatprep.subr.bf16.mxu0 0
    %437 = vmatpush1.bf16.msra.mxu0 0
    %438 = vmatprep.subr.bf16.mxu0 0
    %439 = vmatpush1.bf16.msra.mxu0 0
    %440 = vmatprep.subr.bf16.mxu0 0
    %441 = vmatpush1.bf16.msra.mxu0 0
    %442 = vmatprep.subr.bf16.mxu0 0
    %443 = vmatpush1.bf16.msra.mxu0 0
    %444 = vmatprep.subr.bf16.mxu0 0
    %445 = vmatpush1.bf16.msra.mxu0 0
    %446 = vmatprep.subr.bf16.mxu0 0
    %447 = vmatpush1.bf16.msra.mxu0 0
    %448 = vmatprep.subr.bf16.mxu0 0
    %449 = vmatpush1.bf16.msra.mxu0 0
    %450 = vmatprep.subr.bf16.mxu0 0
    %451 = vmatpush1.bf16.msra.mxu0 0
    %452 = vmatprep.subr.bf16.mxu0 0
    %453 = vmatpush1.bf16.msra.mxu0 0
    %454 = vmatprep.subr.bf16.mxu0 0
    %455 = vmatpush1.bf16.msra.mxu0 0
    %456 = vmatprep.subr.bf16.mxu0 0
    %457 = vmatpush1.bf16.msra.mxu0 0
    %458 = vmatprep.mubr.bf16.mxu0 0
    %459 = vmatmul.mubr.bf16.gmra.mrb[0].mxu0 %v424
    %v460 = vpop.f32.mrb[0].mxu0
    %v461 = vadd.f32 %v409, %v460
    %v462 = vpop.f32.mrb[0].mxu0
    %v463 = vpop.f32.mrb[0].mxu0
    %v464 = vadd.f32 %v409, %v463
    %v465 = vpop.f32.mrb[0].mxu0
    %466 = vdwg.mxu0
    %v467 = vmax.f32 %v461, 0.0
    %v468 = vmax.f32 %v464, 0.0
    %v469 = vpack.c.bf16 %v468, %v467
    %v470 = vld [vmem:[%s10] sm:$0xf]
    %v471 = vld [vmem:[%s10 + $0x4] sm:$0xf]
    %v472 = vld [vmem:[%s10 + $0x8] sm:$0xf]
    %v473 = vld [vmem:[%s10 + $0xc] sm:$0xf]
    %v474 = vld [vmem:[%s11] sm:$0x1]
    %v476 = vlaneseq
    %v477 = vshrl.u32 %v476, 7
    %v478 = vsub.s32 0, %v477
    %v479 = vrot.slane %v474, %v478
    %v485 = vunpack.c.l.b16 %v470
    %v486 = vunpack.c.l.b16 %v471
    %v487 = vunpack.c.l.b16 %v472
    %v488 = vunpack.c.l.b16 %v473
    %v489 = vpack.c.b16 %v486, %v485
    %v490 = vpack.c.b16 %v488, %v487
    %v494 = vsel %vm104, %v469, 0
    %496 = vmatprep.subr.bf16.mxu0 0
    %497 = vmatpush1.bf16.msra.mxu0 %v489
    %498 = vmatprep.subr.bf16.mxu0 0
    %499 = vmatpush1.bf16.msra.mxu0 %v490
    %500 = vmatprep.subr.bf16.mxu0 0
    %501 = vmatpush1.bf16.msra.mxu0 0
    %502 = vmatprep.subr.bf16.mxu0 0
    %503 = vmatpush1.bf16.msra.mxu0 0
    %504 = vmatprep.subr.bf16.mxu0 0
    %505 = vmatpush1.bf16.msra.mxu0 0
    %506 = vmatprep.subr.bf16.mxu0 0
    %507 = vmatpush1.bf16.msra.mxu0 0
    %508 = vmatprep.subr.bf16.mxu0 0
    %509 = vmatpush1.bf16.msra.mxu0 0
    %510 = vmatprep.subr.bf16.mxu0 0
    %511 = vmatpush1.bf16.msra.mxu0 0
    %512 = vmatprep.subr.bf16.mxu0 0
    %513 = vmatpush1.bf16.msra.mxu0 0
    %514 = vmatprep.subr.bf16.mxu0 0
    %515 = vmatpush1.bf16.msra.mxu0 0
    %516 = vmatprep.subr.bf16.mxu0 0
    %517 = vmatpush1.bf16.msra.mxu0 0
    %518 = vmatprep.subr.bf16.mxu0 0
    %519 = vmatpush1.bf16.msra.mxu0 0
    %520 = vmatprep.subr.bf16.mxu0 0
    %521 = vmatpush1.bf16.msra.mxu0 0
    %522 = vmatprep.subr.bf16.mxu0 0
    %523 = vmatpush1.bf16.msra.mxu0 0
    %524 = vmatprep.subr.bf16.mxu0 0
    %525 = vmatpush1.bf16.msra.mxu0 0
    %526 = vmatprep.subr.bf16.mxu0 0
    %527 = vmatpush1.bf16.msra.mxu0 0
    %528 = vmatprep.mubr.bf16.mxu0 0
    %529 = vmatmul.mubr.bf16.gmra.mrb[0].mxu0 %v494
    %v530 = vpop.f32.mrb[0].mxu0
    %v531 = vadd.f32 %v479, %v530
    %v532 = vpop.f32.mrb[0].mxu0
    %v533 = vpop.f32.mrb[0].mxu0
    %v534 = vadd.f32 %v479, %v533
    %v535 = vpop.f32.mrb[0].mxu0
    %536 = vdwg.mxu0
    %v537 = vsel %vm104, %v393, 0.0
    %v538 = vsel %vm104, %v396, 0.0
    %v539 = vadd.f32 %v537, %v538
    %v540 = vrot.slane %v539, 4
    %v541 = vadd.f32 %v539, %v540
    %v542 = vrot.slane %v541, 2
    %v543 = vadd.f32 %v541, %v542
    %v544 = vrot.slane %v543, 1
    %v545 = vadd.f32 %v543, %v544
    %v546 = vrcp.pop 16.0
    %v547 = vmul.f32 %v545, %v546
    %v548 = vpack.c.bf16 %v547, %v547
    %v549 = vld [vmem:[%s12] sm:$0xf]
    %v550 = vld [vmem:[%s12 + $0x4] sm:$0xf]
    %v551 = vld [vmem:[%s12 + $0x8] sm:$0xf]
    %v552 = vld [vmem:[%s12 + $0xc] sm:$0xf]
    %v553 = vld [vmem:[%s13] sm:$0x1]
    %v558 = vunpack.c.l.b16 %v549
    %v559 = vunpack.c.l.b16 %v550
    %v560 = vunpack.c.l.b16 %v551
    %v561 = vunpack.c.l.b16 %v552
    %v562 = vpack.c.b16 %v559, %v558
    %v563 = vpack.c.b16 %v561, %v560
    %v567 = vsel %vm104, %v548, 0
    %569 = vmatprep.subr.bf16.mxu0 0
    %570 = vmatpush1.bf16.msra.mxu0 %v562
    %571 = vmatprep.subr.bf16.mxu0 0
    %572 = vmatpush1.bf16.msra.mxu0 %v563
    %573 = vmatprep.subr.bf16.mxu0 0
    %574 = vmatpush1.bf16.msra.mxu0 0
    %575 = vmatprep.subr.bf16.mxu0 0
    %576 = vmatpush1.bf16.msra.mxu0 0
    %577 = vmatprep.subr.bf16.mxu0 0
    %578 = vmatpush1.bf16.msra.mxu0 0
    %579 = vmatprep.subr.bf16.mxu0 0
    %580 = vmatpush1.bf16.msra.mxu0 0
    %581 = vmatprep.subr.bf16.mxu0 0
    %582 = vmatpush1.bf16.msra.mxu0 0
    %583 = vmatprep.subr.bf16.mxu0 0
    %584 = vmatpush1.bf16.msra.mxu0 0
    %585 = vmatprep.subr.bf16.mxu0 0
    %586 = vmatpush1.bf16.msra.mxu0 0
    %587 = vmatprep.subr.bf16.mxu0 0
    %588 = vmatpush1.bf16.msra.mxu0 0
    %589 = vmatprep.subr.bf16.mxu0 0
    %590 = vmatpush1.bf16.msra.mxu0 0
    %591 = vmatprep.subr.bf16.mxu0 0
    %592 = vmatpush1.bf16.msra.mxu0 0
    %593 = vmatprep.subr.bf16.mxu0 0
    %594 = vmatpush1.bf16.msra.mxu0 0
    %595 = vmatprep.subr.bf16.mxu0 0
    %596 = vmatpush1.bf16.msra.mxu0 0
    %597 = vmatprep.subr.bf16.mxu0 0
    %598 = vmatpush1.bf16.msra.mxu0 0
    %599 = vmatprep.subr.bf16.mxu0 0
    %600 = vmatpush1.bf16.msra.mxu0 0
    %601 = vmatprep.mubr.bf16.mxu0 0
    %602 = vmatmul.mubr.bf16.gmra.mrb[0].mxu0 %v567
    %v603 = vpop.f32.mrb[0].mxu0
    %v604 = vadd.f32 %v553, %v603
    %v605 = vpop.f32.mrb[0].mxu0
    %v606 = vpop.f32.mrb[0].mxu0
    %v607 = vpop.f32.mrb[0].mxu0
    %608 = vdwg.mxu0
    %v609 = vmax.f32 %v604, 0.0
    %v610 = vpack.c.bf16 %v609, %v609
    %v611 = vld [vmem:[%s14] sm:$0xf]
    %v612 = vld [vmem:[%s14 + $0x4] sm:$0xf]
    %v613 = vld [vmem:[%s14 + $0x8] sm:$0xf]
    %v614 = vld [vmem:[%s14 + $0xc] sm:$0xf]
    %v615 = vld [vmem:[#allocation2] sm:$0x1]
    %v620 = vunpack.c.l.b16 %v611
    %v621 = vunpack.c.l.b16 %v612
    %v622 = vunpack.c.l.b16 %v613
    %v623 = vunpack.c.l.b16 %v614
    %v624 = vpack.c.b16 %v621, %v620
    %v625 = vpack.c.b16 %v623, %v622
    %v629 = vsel %vm104, %v610, 0
    %631 = vmatprep.subr.bf16.mxu0 0
    %632 = vmatpush1.bf16.msra.mxu0 %v624
    %633 = vmatprep.subr.bf16.mxu0 0
    %634 = vmatpush1.bf16.msra.mxu0 %v625
    %635 = vmatprep.subr.bf16.mxu0 0
    %636 = vmatpush1.bf16.msra.mxu0 0
    %637 = vmatprep.subr.bf16.mxu0 0
    %638 = vmatpush1.bf16.msra.mxu0 0
    %639 = vmatprep.subr.bf16.mxu0 0
    %640 = vmatpush1.bf16.msra.mxu0 0
    %641 = vmatprep.subr.bf16.mxu0 0
    %642 = vmatpush1.bf16.msra.mxu0 0
    %643 = vmatprep.subr.bf16.mxu0 0
    %644 = vmatpush1.bf16.msra.mxu0 0
    %645 = vmatprep.subr.bf16.mxu0 0
    %646 = vmatpush1.bf16.msra.mxu0 0
    %647 = vmatprep.subr.bf16.mxu0 0
    %648 = vmatpush1.bf16.msra.mxu0 0
    %649 = vmatprep.subr.bf16.mxu0 0
    %650 = vmatpush1.bf16.msra.mxu0 0
    %651 = vmatprep.subr.bf16.mxu0 0
    %652 = vmatpush1.bf16.msra.mxu0 0
    %653 = vmatprep.subr.bf16.mxu0 0
    %654 = vmatpush1.bf16.msra.mxu0 0
    %655 = vmatprep.subr.bf16.mxu0 0
    %656 = vmatpush1.bf16.msra.mxu0 0
    %657 = vmatprep.subr.bf16.mxu0 0
    %658 = vmatpush1.bf16.msra.mxu0 0
    %659 = vmatprep.subr.bf16.mxu0 0
    %660 = vmatpush1.bf16.msra.mxu0 0
    %661 = vmatprep.subr.bf16.mxu0 0
    %662 = vmatpush1.bf16.msra.mxu0 0
    %663 = vmatprep.mubr.bf16.mxu0 0
    %664 = vmatmul.mubr.bf16.gmra.mrb[0].mxu0 %v629
    %v665 = vpop.f32.mrb[0].mxu0
    %v666 = vadd.f32 %v615, %v665
    %v667 = vpop.f32.mrb[0].mxu0
    %v668 = vpop.f32.mrb[0].mxu0
    %v669 = vpop.f32.mrb[0].mxu0
    %670 = vdwg.mxu0
    %v671 = vld [vmem:[%s2] sm:$0xff]
    %v672 = vld [vmem:[%s2 + $0x8] sm:$0xff]
    %673 = vset.pattern.permute.xlu0 0
    %674 = vperm.xlu0 %673, %v671
    %v675 = vpop.permute.xlu0 %674
    %676 = vset.pattern.permute.xlu0 0
    %677 = vperm.xlu0 %676, %v672
    %v678 = vpop.permute.xlu0 %677
    %vm679 = vcmp.eq.s32.totalorder %v675, %v77
    %vm680 = vcmp.eq.s32.totalorder %v678, %v77
    %v681 = vsel %vm679, 1, 0
    %v682 = vsel %vm680, 1, 0
    %v683 = vcvt.s32.f32 %v681
    %v684 = vcvt.s32.f32 %v682
    %vm685 = vcmask 31744
    %v686 = vsel %vm685, %v683, 0.0
    %v687 = vsel %vm685, %v684, 0.0
    %v688 = vadd.f32 %v686, %v687
    %v689 = vrot.slane %v688, 4
    %v690 = vadd.f32 %v688, %v689
    %v691 = vrot.slane %v690, 2
    %v692 = vadd.f32 %v690, %v691
    %v693 = vrot.slane %v692, 1
    %v694 = vadd.f32 %v692, %v693
    %v695 = vmul.f32 %v683, %v694
    %v696 = vmul.f32 %v684, %v694
    %v697 = vsel %vm685, %v695, 0.0
    %698 = vadd.xlane.f32.xlu0 %v697
    %v699 = vpop.xlane.xlu0 %698
    %v700 = vsel %vm685, %v696, 0.0
    %701 = vadd.xlane.f32.xlu0 %v700
    %v702 = vpop.xlane.xlu0 %701
    %vm703 = vcmp.le.f32.partialorder %v699, 1.0
    %vm704 = vcmp.le.f32.partialorder %v702, 1.0
    %vm705 = vcmp.ge.s32.totalorder %v77, 1
    %vm706 = vcmp.le.s32.totalorder %v77, 4
    %vm707 = vmand %vm705, %vm706
    %v708 = vsub.s32 %v77, 1
    %vm709 = vcmp.ne.s32.totalorder %v708, %v675
    %vm710 = vcmp.ne.s32.totalorder %v708, %v678
    %v711 = vsel %vm703, 1, 0
    %v712 = vsel %vm704, 1, 0
    %vm713 = vcmp.eq.s32.totalorder %v711, 1
    %vm714 = vcmp.eq.s32.totalorder %v712, 1
    %vm715 = vmand %vm713, %vm709
    %vm716 = vmand %vm714, %vm710
    %vm717 = vmand %vm707, %vm715
    %vm718 = vmand %vm707, %vm716
    %v719 = vsel %vm717, -inf, %v531
    %v720 = vsel %vm718, -inf, %v534
    %vm721 = vcmp.eq.s32.totalorder %v77, 5
    %s723 = vtos %v666
    %v724 = vstv %s723
    %v726 = vsel %vm721, %v724, 0.0
    %v727 = vadd.f32 %v719, %v726
    %v728 = vadd.f32 %v720, %v726
    %729 = vst [vmem:[#allocation3] sm:$0xff] %v727
    %730 = vst [vmem:[#allocation3 + $0x8] sm:$0xff] %v728
    // Predicated region
    $region66: #{tpu_custom_call.1} parent=1 // pred_check
      _
    $region67: #{tpu_custom_call.1} parent=1 // pred_check_branch
      %732 = sbr.rel (0) target = $region69
    $region68: #{tpu_custom_call.1} parent=1 // pred_region
      %s734 = ssub.s32 256, 256
      %735 = vsyncadd [#allocation4], %s734
      %s736 = sshll.u32 [#allocation3], 4
      %s737 = int_to_ptr.vmem [resolvable:$true] %s736
      %742 = dma.vmem_to_hbm [thread:$0]  %s737, 256, %s16, [#allocation4], 128, 128, 8
    $region69: #{tpu_custom_call.1} parent=1 // pred_fallthru
      _
    // Predicated region
    $region70: #{tpu_custom_call.1} parent=1 // pred_check
      _
    $region71: #{tpu_custom_call.1} parent=1 // pred_check_branch
      %744 = sbr.rel (0) target = $region73
    $region72: #{tpu_custom_call.1} parent=1 // pred_region
      %745 = dma.done [#allocation4], 256
    $region73: #{tpu_custom_call.1} parent=1 // pred_fallthru
      _
    %746 = vsyncpa [#allocation4], 1

</llo_original>
